<compile_context>
chip_gen: v6e
topology: v6e:2x2x1
jax: 0.10.0
libtpu: 0.0.40
codegen_flags: <defaults>
</compile_context>

<pallas_src>
import functools

import jax
import jax.numpy as jnp
from jax.experimental import pallas as pl
from jax.experimental.pallas import tpu as pltpu


def _round_up(x, m):
    return ((x + m - 1) // m) * m


def _choose_tiling(batch, tile_b):
    """Pick (tile, padded_batch): tile multiple of 8, >=2 grid steps if possible."""
    b8 = _round_up(max(batch, 1), 8)
    n_steps = pl.cdiv(b8, min(tile_b, b8))
    if b8 > 8:
        # v7x has two TensorCores; keep at least 2 "parallel" grid steps.
        n_steps = max(n_steps, 2)
    tile = _round_up(pl.cdiv(b8, n_steps), 8)
    b_pad = _round_up(b8, tile)
    return tile, b_pad


def _mlp_kernel(
    goal_ref, state_ref,                 # (TILE_B, numGoal) / (TILE_B, numStates), bf16
    w1g_ref, b1g_ref, w1s_ref, b1s_ref,  # branch layer 1 (weights bf16, biases f32)
    w2g_ref, b2g_ref, w2s_ref, b2s_ref,  # branch layer 2
    w1c_ref, b1c_ref,                    # combined (256, 256)
    w2c_ref, b2c_ref,                    # combined (256, 128)
    w3c_ref, b3c_ref,                    # combined (128, 128) lane-padded
    out_ref,                             # (TILE_B, 128) bf16, classes in lanes [:classes]
):
    compute = w1c_ref.dtype              # bf16 carry dtype

    def linear(x, w_ref, b_ref):
        # bf16 x bf16 on the MXU with f32 accumulation; bias add stays f32.
        y = jnp.dot(x, w_ref[...], preferred_element_type=jnp.float32)
        return y + b_ref[...]

    def relu_c(y_f32):
        # relu in f32 (safe on v5e: no bf16 VALU), then one cast to the carry dtype.
        return jnp.maximum(y_f32, 0.0).astype(compute)

    g = goal_ref[...]                                   # already bf16
    s = state_ref[...]

    g = relu_c(linear(g, w1g_ref, b1g_ref))             # (TILE_B, 64)
    s = relu_c(linear(s, w1s_ref, b1s_ref))             # (TILE_B, 64)
    g = relu_c(linear(g, w2g_ref, b2g_ref))             # (TILE_B, 128)
    s = relu_c(linear(s, w2s_ref, b2s_ref))             # (TILE_B, 128)

    # torch.cat((goal, state), dim=1): 128-lane aligned -> vreg-cheap copy.
    x = jnp.concatenate([g, s], axis=-1)                # (TILE_B, 256) bf16

    x = relu_c(linear(x, w1c_ref, b1c_ref))             # (TILE_B, 256)
    x = relu_c(linear(x, w2c_ref, b2c_ref))             # (TILE_B, 128)
    y = linear(x, w3c_ref, b3c_ref)                     # (TILE_B, 128) f32

    out_ref[...] = y.astype(out_ref.dtype)              # lane-dense bf16 store


def _pack_params(p, compute_dtype):
    """Cast weights to the compute dtype (biases stay f32); pad final layer to 128 lanes."""
    classes = p["w3c"].shape[1]
    w3c = jnp.zeros((p["w3c"].shape[0], 128), jnp.float32).at[:, :classes].set(p["w3c"])
    b3c = jnp.zeros((1, 128), jnp.float32).at[:, :classes].set(p["b3c"])

    cast = lambda a: a.astype(compute_dtype)
    return (cast(p["w1g"]), p["b1g"], cast(p["w1s"]), p["b1s"],
            cast(p["w2g"]), p["b2g"], cast(p["w2s"]), p["b2s"],
            cast(p["w1c"]), p["b1c"], cast(p["w2c"]), p["b2c"],
            cast(w3c), b3c)


@functools.partial(jax.jit, static_argnames=("tile_b", "compute_dtype", "out_dtype"))
def multi_input_model_forward(state, goal, params, *, tile_b=2048,
                              compute_dtype=jnp.bfloat16,
                              out_dtype=jnp.bfloat16):
    """state: (B, numStates), goal: (B, numGoal). Returns (B, classes) float32."""
    B = state.shape[0]
    num_states = state.shape[1]
    num_goal = goal.shape[1]
    classes = params["w3c"].shape[1]

    tile, b_pad = _choose_tiling(B, tile_b)

    def prep(a):
        a = a.astype(compute_dtype)                 # feed the kernel bf16 directly
        if b_pad != B:
            a = jnp.pad(a, ((0, b_pad - B), (0, 0)))
        return a

    goal_p, state_p = prep(goal), prep(state)
    packed = _pack_params(params, compute_dtype)

    def act_spec(n):
        return pl.BlockSpec((tile, n), lambda i: (i, 0))

    # Full-array blocks + constant index_map => weights/biases stay VMEM-resident
    # across batch-tile grid steps.  (~300 KiB; single-buffering them via
    # pl.Buffered(1) would save a little more VMEM headroom if ever needed.)
    w_specs = [pl.BlockSpec(a.shape, lambda i: (0, 0)) for a in packed]
    out_spec = pl.BlockSpec((tile, 128), lambda i: (i, 0))

    # VMEM per step @ tile=2048: out 2x512 KiB (bf16) + weights ~0.6 MiB (dbl-buf)
    # + activation slabs a few MiB => far under the 32 MiB default scoped limit
    # (also on v7x); no explicit vmem_limit_bytes needed at this tile size.
    out = pl.pallas_call(
        _mlp_kernel,
        out_shape=jax.ShapeDtypeStruct((b_pad, 128), out_dtype),
        grid=(b_pad // tile,),
        in_specs=[act_spec(num_goal), act_spec(num_states)] + w_specs,
        out_specs=out_spec,
        compiler_params=pltpu.CompilerParams(
            dimension_semantics=("parallel",)),
    )(goal_p, state_p, *packed)

    return out[:B, :classes].astype(jnp.float32)


def init_params(key, num_states=3, num_goal=4, classes=6):
    """Deterministic synthetic params. Weights stored as (in, out); biases as (1, out)."""
    def lin(key, fan_in, fan_out):
        kw, kb = jax.random.split(key)
        bound = 1.0 / jnp.sqrt(fan_in)
        w = jax.random.uniform(kw, (fan_in, fan_out), jnp.float32, -bound, bound)
        b = jax.random.uniform(kb, (1, fan_out), jnp.float32, -bound, bound)
        return w, b

    keys = jax.random.split(key, 7)
    p = {}
    p["w1s"], p["b1s"] = lin(keys[0], num_states, 64)
    p["w1g"], p["b1g"] = lin(keys[1], num_goal, 64)
    p["w2s"], p["b2s"] = lin(keys[2], 64, 128)
    p["w2g"], p["b2g"] = lin(keys[3], 64, 128)
    p["w1c"], p["b1c"] = lin(keys[4], 256, 256)
    p["w2c"], p["b2c"] = lin(keys[5], 256, 128)
    p["w3c"], p["b3c"] = lin(keys[6], 128, classes)
    return p


def reference_forward(state, goal, p, compute_dtype=jnp.float32):
    """Pure-JAX reference mirroring the PyTorch forward (optionally with matched casts)."""
    def lin(x, w, b):
        y = jnp.dot(x.astype(compute_dtype), w.astype(compute_dtype),
                    preferred_element_type=jnp.float32)
        return y + b

    s = jax.nn.relu(lin(state, p["w1s"], p["b1s"]))
    g = jax.nn.relu(lin(goal, p["w1g"], p["b1g"]))
    s = jax.nn.relu(lin(s, p["w2s"], p["b2s"]))
    g = jax.nn.relu(lin(g, p["w2g"], p["b2g"]))
    x = jnp.concatenate([g, s], axis=1)
    x = jax.nn.relu(lin(x, p["w1c"], p["b1c"]))
    x = jax.nn.relu(lin(x, p["w2c"], p["b2c"]))
    return lin(x, p["w3c"], p["b3c"])


if __name__ == "__main__":
    key = jax.random.PRNGKey(0)
    k_params, k_state, k_goal = jax.random.split(key, 3)

    batch, num_states, num_goal, classes = 2, 3, 4, 6
    params = init_params(k_params, num_states, num_goal, classes)
    state = jax.random.normal(k_state, (batch, num_states), jnp.float32)
    goal = jax.random.normal(k_goal, (batch, num_goal), jnp.float32)

    out = multi_input_model_forward(state, goal, params)
    out = jax.block_until_ready(out)
    assert out.shape == (batch, classes), out.shape

    # Check vs. a reference with matching bf16-matmul / f32-accumulate casts
    # (only remaining delta: the kernel's final bf16 output rounding).
    ref_bf16 = reference_forward(state, goal, params, compute_dtype=jnp.bfloat16)
    assert jnp.allclose(out, ref_bf16, atol=1e-2, rtol=2e-2), "mismatch vs bf16 reference"

    # Looser check vs. the full-precision PyTorch-equivalent reference.
    ref_f32 = reference_forward(state, goal, params, compute_dtype=jnp.float32)
    assert jnp.allclose(out, ref_f32, atol=5e-2, rtol=5e-2), "mismatch vs f32 reference"

    print("KERNEL_OK")
</pallas_src>

<mosaic_0001>
module attributes {stable_mosaic.version = 11 : i64} {
  func.func @_mlp_kernel(%arg0: i32, %arg1: memref<8x4xbf16, #tpu.memory_space<vmem>>, %arg2: memref<8x3xbf16, #tpu.memory_space<vmem>>, %arg3: memref<4x64xbf16, #tpu.memory_space<vmem>>, %arg4: memref<1x64xf32, #tpu.memory_space<vmem>>, %arg5: memref<3x64xbf16, #tpu.memory_space<vmem>>, %arg6: memref<1x64xf32, #tpu.memory_space<vmem>>, %arg7: memref<64x128xbf16, #tpu.memory_space<vmem>>, %arg8: memref<1x128xf32, #tpu.memory_space<vmem>>, %arg9: memref<64x128xbf16, #tpu.memory_space<vmem>>, %arg10: memref<1x128xf32, #tpu.memory_space<vmem>>, %arg11: memref<256x256xbf16, #tpu.memory_space<vmem>>, %arg12: memref<1x256xf32, #tpu.memory_space<vmem>>, %arg13: memref<256x128xbf16, #tpu.memory_space<vmem>>, %arg14: memref<1x128xf32, #tpu.memory_space<vmem>>, %arg15: memref<128x128xbf16, #tpu.memory_space<vmem>>, %arg16: memref<1x128xf32, #tpu.memory_space<vmem>>, %arg17: memref<8x128xbf16, #tpu.memory_space<vmem>>) attributes {dimension_semantics = [#tpu.dimension_semantics<parallel>], iteration_bounds = array<i64: 1>, scalar_prefetch = 0 : i64, scratch_operands = 0 : i64, tpu.core_type = #tpu.core_type<tc>, window_params = [{transform_indices = @transform_0, window_bounds = array<i64: 8, 4>}, {transform_indices = @transform_1, window_bounds = array<i64: 8, 3>}, {pipeline_mode = #tpu.pipeline_mode<synchronous>, transform_indices = @transform_2, window_bounds = array<i64: 4, 64>}, {pipeline_mode = #tpu.pipeline_mode<synchronous>, transform_indices = @transform_3, window_bounds = array<i64: 1, 64>}, {pipeline_mode = #tpu.pipeline_mode<synchronous>, transform_indices = @transform_4, window_bounds = array<i64: 3, 64>}, {pipeline_mode = #tpu.pipeline_mode<synchronous>, transform_indices = @transform_5, window_bounds = array<i64: 1, 64>}, {pipeline_mode = #tpu.pipeline_mode<synchronous>, transform_indices = @transform_6, window_bounds = array<i64: 64, 128>}, {pipeline_mode = #tpu.pipeline_mode<synchronous>, transform_indices = @transform_7, window_bounds = array<i64: 1, 128>}, {pipeline_mode = #tpu.pipeline_mode<synchronous>, transform_indices = @transform_8, window_bounds = array<i64: 64, 128>}, {pipeline_mode = #tpu.pipeline_mode<synchronous>, transform_indices = @transform_9, window_bounds = array<i64: 1, 128>}, {pipeline_mode = #tpu.pipeline_mode<synchronous>, transform_indices = @transform_10, window_bounds = array<i64: 256, 256>}, {pipeline_mode = #tpu.pipeline_mode<synchronous>, transform_indices = @transform_11, window_bounds = array<i64: 1, 256>}, {pipeline_mode = #tpu.pipeline_mode<synchronous>, transform_indices = @transform_12, window_bounds = array<i64: 256, 128>}, {pipeline_mode = #tpu.pipeline_mode<synchronous>, transform_indices = @transform_13, window_bounds = array<i64: 1, 128>}, {pipeline_mode = #tpu.pipeline_mode<synchronous>, transform_indices = @transform_14, window_bounds = array<i64: 128, 128>}, {pipeline_mode = #tpu.pipeline_mode<synchronous>, transform_indices = @transform_15, window_bounds = array<i64: 1, 128>}, {transform_indices = @transform_16, window_bounds = array<i64: 8, 128>}]} {
    %c0 = arith.constant 0 : index
    %c0_0 = arith.constant 0 : index
    %0 = vector.load %arg1[%c0, %c0_0] : memref<8x4xbf16, #tpu.memory_space<vmem>>, vector<8x4xbf16>
    %c0_1 = arith.constant 0 : index
    %c0_2 = arith.constant 0 : index
    %1 = vector.load %arg2[%c0_1, %c0_2] : memref<8x3xbf16, #tpu.memory_space<vmem>>, vector<8x3xbf16>
    %c0_3 = arith.constant 0 : index
    %c0_4 = arith.constant 0 : index
    %2 = vector.load %arg3[%c0_3, %c0_4] : memref<4x64xbf16, #tpu.memory_space<vmem>>, vector<4x64xbf16>
    %cst = arith.constant dense<0.000000e+00> : vector<8x64xf32>
    %3 = tpu.matmul %0, %2, %cst {dimension_numbers = #tpu.dot_dimension_numbers<[1], [0], [0], [1], [0, 0, 1, 1], [], []>} : vector<8x4xbf16>, vector<4x64xbf16>, vector<8x64xf32> -> vector<8x64xf32>
    %c0_5 = arith.constant 0 : index
    %c0_6 = arith.constant 0 : index
    %4 = vector.load %arg4[%c0_5, %c0_6] : memref<1x64xf32, #tpu.memory_space<vmem>>, vector<1x64xf32>
    %5 = vector.broadcast %4 : vector<1x64xf32> to vector<8x64xf32>
    %6 = arith.addf %3, %5 : vector<8x64xf32>
    %cst_7 = arith.constant 0.000000e+00 : f32
    %7 = vector.broadcast %cst_7 : f32 to vector<8x64xf32>
    %8 = arith.maximumf %6, %7 : vector<8x64xf32>
    %9 = arith.truncf %8 : vector<8x64xf32> to vector<8x64xbf16>
    %c0_8 = arith.constant 0 : index
    %c0_9 = arith.constant 0 : index
    %10 = vector.load %arg5[%c0_8, %c0_9] : memref<3x64xbf16, #tpu.memory_space<vmem>>, vector<3x64xbf16>
    %cst_10 = arith.constant dense<0.000000e+00> : vector<8x64xf32>
    %11 = tpu.matmul %1, %10, %cst_10 {dimension_numbers = #tpu.dot_dimension_numbers<[1], [0], [0], [1], [0, 0, 1, 1], [], []>} : vector<8x3xbf16>, vector<3x64xbf16>, vector<8x64xf32> -> vector<8x64xf32>
    %c0_11 = arith.constant 0 : index
    %c0_12 = arith.constant 0 : index
    %12 = vector.load %arg6[%c0_11, %c0_12] : memref<1x64xf32, #tpu.memory_space<vmem>>, vector<1x64xf32>
    %13 = vector.broadcast %12 : vector<1x64xf32> to vector<8x64xf32>
    %14 = arith.addf %11, %13 : vector<8x64xf32>
    %cst_13 = arith.constant 0.000000e+00 : f32
    %15 = vector.broadcast %cst_13 : f32 to vector<8x64xf32>
    %16 = arith.maximumf %14, %15 : vector<8x64xf32>
    %17 = arith.truncf %16 : vector<8x64xf32> to vector<8x64xbf16>
    %c0_14 = arith.constant 0 : index
    %c0_15 = arith.constant 0 : index
    %18 = vector.load %arg7[%c0_14, %c0_15] : memref<64x128xbf16, #tpu.memory_space<vmem>>, vector<64x128xbf16>
    %cst_16 = arith.constant dense<0.000000e+00> : vector<8x128xf32>
    %19 = tpu.matmul %9, %18, %cst_16 {dimension_numbers = #tpu.dot_dimension_numbers<[1], [0], [0], [1], [0, 0, 1, 1], [], []>} : vector<8x64xbf16>, vector<64x128xbf16>, vector<8x128xf32> -> vector<8x128xf32>
    %c0_17 = arith.constant 0 : index
    %c0_18 = arith.constant 0 : index
    %20 = vector.load %arg8[%c0_17, %c0_18] : memref<1x128xf32, #tpu.memory_space<vmem>>, vector<1x128xf32>
    %21 = vector.broadcast %20 : vector<1x128xf32> to vector<8x128xf32>
    %22 = arith.addf %19, %21 : vector<8x128xf32>
    %cst_19 = arith.constant 0.000000e+00 : f32
    %23 = vector.broadcast %cst_19 : f32 to vector<8x128xf32>
    %24 = arith.maximumf %22, %23 : vector<8x128xf32>
    %25 = arith.truncf %24 : vector<8x128xf32> to vector<8x128xbf16>
    %c0_20 = arith.constant 0 : index
    %c0_21 = arith.constant 0 : index
    %26 = vector.load %arg9[%c0_20, %c0_21] : memref<64x128xbf16, #tpu.memory_space<vmem>>, vector<64x128xbf16>
    %cst_22 = arith.constant dense<0.000000e+00> : vector<8x128xf32>
    %27 = tpu.matmul %17, %26, %cst_22 {dimension_numbers = #tpu.dot_dimension_numbers<[1], [0], [0], [1], [0, 0, 1, 1], [], []>} : vector<8x64xbf16>, vector<64x128xbf16>, vector<8x128xf32> -> vector<8x128xf32>
    %c0_23 = arith.constant 0 : index
    %c0_24 = arith.constant 0 : index
    %28 = vector.load %arg10[%c0_23, %c0_24] : memref<1x128xf32, #tpu.memory_space<vmem>>, vector<1x128xf32>
    %29 = vector.broadcast %28 : vector<1x128xf32> to vector<8x128xf32>
    %30 = arith.addf %27, %29 : vector<8x128xf32>
    %cst_25 = arith.constant 0.000000e+00 : f32
    %31 = vector.broadcast %cst_25 : f32 to vector<8x128xf32>
    %32 = arith.maximumf %30, %31 : vector<8x128xf32>
    %33 = arith.truncf %32 : vector<8x128xf32> to vector<8x128xbf16>
    %34 = tpu.concatenate %25, %33 in 1 : vector<8x128xbf16>, vector<8x128xbf16> -> vector<8x256xbf16>
    %c0_26 = arith.constant 0 : index
    %c0_27 = arith.constant 0 : index
    %35 = vector.load %arg11[%c0_26, %c0_27] : memref<256x256xbf16, #tpu.memory_space<vmem>>, vector<256x256xbf16>
    %cst_28 = arith.constant dense<0.000000e+00> : vector<8x256xf32>
    %36 = tpu.matmul %34, %35, %cst_28 {dimension_numbers = #tpu.dot_dimension_numbers<[1], [0], [0], [1], [0, 0, 1, 1], [], []>} : vector<8x256xbf16>, vector<256x256xbf16>, vector<8x256xf32> -> vector<8x256xf32>
    %c0_29 = arith.constant 0 : index
    %c0_30 = arith.constant 0 : index
    %37 = vector.load %arg12[%c0_29, %c0_30] : memref<1x256xf32, #tpu.memory_space<vmem>>, vector<1x256xf32>
    %38 = vector.broadcast %37 : vector<1x256xf32> to vector<8x256xf32>
    %39 = arith.addf %36, %38 : vector<8x256xf32>
    %cst_31 = arith.constant 0.000000e+00 : f32
    %40 = vector.broadcast %cst_31 : f32 to vector<8x256xf32>
    %41 = arith.maximumf %39, %40 : vector<8x256xf32>
    %42 = arith.truncf %41 : vector<8x256xf32> to vector<8x256xbf16>
    %c0_32 = arith.constant 0 : index
    %c0_33 = arith.constant 0 : index
    %43 = vector.load %arg13[%c0_32, %c0_33] : memref<256x128xbf16, #tpu.memory_space<vmem>>, vector<256x128xbf16>
    %cst_34 = arith.constant dense<0.000000e+00> : vector<8x128xf32>
    %44 = tpu.matmul %42, %43, %cst_34 {dimension_numbers = #tpu.dot_dimension_numbers<[1], [0], [0], [1], [0, 0, 1, 1], [], []>} : vector<8x256xbf16>, vector<256x128xbf16>, vector<8x128xf32> -> vector<8x128xf32>
    %c0_35 = arith.constant 0 : index
    %c0_36 = arith.constant 0 : index
    %45 = vector.load %arg14[%c0_35, %c0_36] : memref<1x128xf32, #tpu.memory_space<vmem>>, vector<1x128xf32>
    %46 = vector.broadcast %45 : vector<1x128xf32> to vector<8x128xf32>
    %47 = arith.addf %44, %46 : vector<8x128xf32>
    %cst_37 = arith.constant 0.000000e+00 : f32
    %48 = vector.broadcast %cst_37 : f32 to vector<8x128xf32>
    %49 = arith.maximumf %47, %48 : vector<8x128xf32>
    %50 = arith.truncf %49 : vector<8x128xf32> to vector<8x128xbf16>
    %c0_38 = arith.constant 0 : index
    %c0_39 = arith.constant 0 : index
    %51 = vector.load %arg15[%c0_38, %c0_39] : memref<128x128xbf16, #tpu.memory_space<vmem>>, vector<128x128xbf16>
    %cst_40 = arith.constant dense<0.000000e+00> : vector<8x128xf32>
    %52 = tpu.matmul %50, %51, %cst_40 {dimension_numbers = #tpu.dot_dimension_numbers<[1], [0], [0], [1], [0, 0, 1, 1], [], []>} : vector<8x128xbf16>, vector<128x128xbf16>, vector<8x128xf32> -> vector<8x128xf32>
    %c0_41 = arith.constant 0 : index
    %c0_42 = arith.constant 0 : index
    %53 = vector.load %arg16[%c0_41, %c0_42] : memref<1x128xf32, #tpu.memory_space<vmem>>, vector<1x128xf32>
    %54 = vector.broadcast %53 : vector<1x128xf32> to vector<8x128xf32>
    %55 = arith.addf %52, %54 : vector<8x128xf32>
    %56 = arith.truncf %55 : vector<8x128xf32> to vector<8x128xbf16>
    %c0_43 = arith.constant 0 : index
    %c0_44 = arith.constant 0 : index
    %57 = vector.load %arg17[%c0_43, %c0_44] : memref<8x128xbf16, #tpu.memory_space<vmem>>, vector<8x128xbf16>
    tpu.vector_store %arg17[%c0_43, %c0_44], %56 {strides = array<i32>} : memref<8x128xbf16, #tpu.memory_space<vmem>>, vector<8x128xbf16>,
    return
  }
  func.func @transform_0(%arg0: i32) -> (i32, i32) {
    %c0_i32 = arith.constant 0 : i32
    %c0_i32_0 = arith.constant 0 : i32
    return %arg0, %c0_i32 : i32, i32
  }
  func.func @transform_1(%arg0: i32) -> (i32, i32) {
    %c0_i32 = arith.constant 0 : i32
    %c0_i32_0 = arith.constant 0 : i32
    return %arg0, %c0_i32 : i32, i32
  }
  func.func @transform_2(%arg0: i32) -> (i32, i32) {
    %c0_i32 = arith.constant 0 : i32
    %c0_i32_0 = arith.constant 0 : i32
    %c0_i32_1 = arith.constant 0 : i32
    return %c0_i32, %c0_i32_0 : i32, i32
  }
  func.func @transform_3(%arg0: i32) -> (i32, i32) {
    %c0_i32 = arith.constant 0 : i32
    %c0_i32_0 = arith.constant 0 : i32
    %c0_i32_1 = arith.constant 0 : i32
    return %c0_i32, %c0_i32_0 : i32, i32
  }
  func.func @transform_4(%arg0: i32) -> (i32, i32) {
    %c0_i32 = arith.constant 0 : i32
    %c0_i32_0 = arith.constant 0 : i32
    %c0_i32_1 = arith.constant 0 : i32
    return %c0_i32, %c0_i32_0 : i32, i32
  }
  func.func @transform_5(%arg0: i32) -> (i32, i32) {
    %c0_i32 = arith.constant 0 : i32
    %c0_i32_0 = arith.constant 0 : i32
    %c0_i32_1 = arith.constant 0 : i32
    return %c0_i32, %c0_i32_0 : i32, i32
  }
  func.func @transform_6(%arg0: i32) -> (i32, i32) {
    %c0_i32 = arith.constant 0 : i32
    %c0_i32_0 = arith.constant 0 : i32
    %c0_i32_1 = arith.constant 0 : i32
    return %c0_i32, %c0_i32_0 : i32, i32
  }
  func.func @transform_7(%arg0: i32) -> (i32, i32) {
    %c0_i32 = arith.constant 0 : i32
    %c0_i32_0 = arith.constant 0 : i32
    %c0_i32_1 = arith.constant 0 : i32
    return %c0_i32, %c0_i32_0 : i32, i32
  }
  func.func @transform_8(%arg0: i32) -> (i32, i32) {
    %c0_i32 = arith.constant 0 : i32
    %c0_i32_0 = arith.constant 0 : i32
    %c0_i32_1 = arith.constant 0 : i32
    return %c0_i32, %c0_i32_0 : i32, i32
  }
  func.func @transform_9(%arg0: i32) -> (i32, i32) {
    %c0_i32 = arith.constant 0 : i32
    %c0_i32_0 = arith.constant 0 : i32
    %c0_i32_1 = arith.constant 0 : i32
    return %c0_i32, %c0_i32_0 : i32, i32
  }
  func.func @transform_10(%arg0: i32) -> (i32, i32) {
    %c0_i32 = arith.constant 0 : i32
    %c0_i32_0 = arith.constant 0 : i32
    %c0_i32_1 = arith.constant 0 : i32
    return %c0_i32, %c0_i32_0 : i32, i32
  }
  func.func @transform_11(%arg0: i32) -> (i32, i32) {
    %c0_i32 = arith.constant 0 : i32
    %c0_i32_0 = arith.constant 0 : i32
    %c0_i32_1 = arith.constant 0 : i32
    return %c0_i32, %c0_i32_0 : i32, i32
  }
  func.func @transform_12(%arg0: i32) -> (i32, i32) {
    %c0_i32 = arith.constant 0 : i32
    %c0_i32_0 = arith.constant 0 : i32
    %c0_i32_1 = arith.constant 0 : i32
    return %c0_i32, %c0_i32_0 : i32, i32
  }
  func.func @transform_13(%arg0: i32) -> (i32, i32) {
    %c0_i32 = arith.constant 0 : i32
    %c0_i32_0 = arith.constant 0 : i32
    %c0_i32_1 = arith.constant 0 : i32
    return %c0_i32, %c0_i32_0 : i32, i32
  }
  func.func @transform_14(%arg0: i32) -> (i32, i32) {
    %c0_i32 = arith.constant 0 : i32
    %c0_i32_0 = arith.constant 0 : i32
    %c0_i32_1 = arith.constant 0 : i32
    return %c0_i32, %c0_i32_0 : i32, i32
  }
  func.func @transform_15(%arg0: i32) -> (i32, i32) {
    %c0_i32 = arith.constant 0 : i32
    %c0_i32_0 = arith.constant 0 : i32
    %c0_i32_1 = arith.constant 0 : i32
    return %c0_i32, %c0_i32_0 : i32, i32
  }
  func.func @transform_16(%arg0: i32) -> (i32, i32) {
    %c0_i32 = arith.constant 0 : i32
    %c0_i32_0 = arith.constant 0 : i32
    return %arg0, %c0_i32 : i32, i32
  }
}

</mosaic_0001>

<llo_original>
// kernel: multi_input_model_forward.1
$region0: #{multi_input_model_forward.1}
  #allocation0 [shape = 'u32[]', space=smem, size = 0x4, offset = 0x4, fixed_abs, tag = 'smem constant byte address 0x4 - core index']
  #allocation1 [shape = 'u32[144,128]{1,0:T(1,128)}', space=vmem, size = 0x12000, scoped, tag = 'internal scratch']
  %s0 = inlined_call_operand.vmem [shape: bf16[8,4], index: 0, kind: input, shape index: {}]
  %s1 = inlined_call_operand.vmem [shape: bf16[8,3], index: 1, kind: input, shape index: {}]
  %s2 = inlined_call_operand.vmem [shape: bf16[4,64], index: 2, kind: input, shape index: {}]
  %s3 = inlined_call_operand.vmem [shape: f32[1,64], index: 3, kind: input, shape index: {}]
  %s4 = inlined_call_operand.vmem [shape: bf16[3,64], index: 4, kind: input, shape index: {}]
  %s5 = inlined_call_operand.vmem [shape: f32[1,64], index: 5, kind: input, shape index: {}]
  %s6 = inlined_call_operand.vmem [shape: bf16[64,128], index: 6, kind: input, shape index: {}]
  %s7 = inlined_call_operand.vmem [shape: f32[1,128], index: 7, kind: input, shape index: {}]
  %s8 = inlined_call_operand.vmem [shape: bf16[64,128], index: 8, kind: input, shape index: {}]
  %s9 = inlined_call_operand.vmem [shape: f32[1,128], index: 9, kind: input, shape index: {}]
  %s10 = inlined_call_operand.vmem [shape: bf16[256,256], index: 10, kind: input, shape index: {}]
  %s11 = inlined_call_operand.vmem [shape: f32[1,256], index: 11, kind: input, shape index: {}]
  %s12 = inlined_call_operand.vmem [shape: bf16[256,128], index: 12, kind: input, shape index: {}]
  %s13 = inlined_call_operand.vmem [shape: f32[1,128], index: 13, kind: input, shape index: {}]
  %s14 = inlined_call_operand.vmem [shape: bf16[128,128], index: 14, kind: input, shape index: {}]
  %s15 = inlined_call_operand.vmem [shape: f32[1,128], index: 15, kind: input, shape index: {}]
  %s16 = inlined_call_operand.vmem [shape: bf16[8,128], index: 16, kind: output, shape index: {}]
  %s17 = sld [smem:[#allocation0]]
  $region74: #{multi_input_model_forward.1} parent=0
    _
  %s19 = ssub.s32 1, %s17
  %s20 = scalar_select 0, %s19, %s17
  // Predicated region
  $region2: #{multi_input_model_forward.1} parent=0 // pred_check
    _
  $region3: #{multi_input_model_forward.1} parent=0 // pred_check_branch
    %22 = sbr.rel (0) target = $region5
  $region4: #{multi_input_model_forward.1} parent=0 // pred_region
    _
  $region5: #{multi_input_model_forward.1} parent=0 // pred_fallthru
    _
  // Predicated region
  $region6: #{multi_input_model_forward.1} parent=0 // pred_check
    _
  $region7: #{multi_input_model_forward.1} parent=0 // pred_check_branch
    %24 = sbr.rel (0) target = $region9
  $region8: #{multi_input_model_forward.1} parent=0 // pred_region
    _
  $region9: #{multi_input_model_forward.1} parent=0 // pred_fallthru
    _
  // Predicated region
  $region10: #{multi_input_model_forward.1} parent=0 // pred_check
    _
  $region11: #{multi_input_model_forward.1} parent=0 // pred_check_branch
    %26 = sbr.rel (0) target = $region13
  $region12: #{multi_input_model_forward.1} parent=0 // pred_region
    _
  $region13: #{multi_input_model_forward.1} parent=0 // pred_fallthru
    _
  // Predicated region
  $region14: #{multi_input_model_forward.1} parent=0 // pred_check
    _
  $region15: #{multi_input_model_forward.1} parent=0 // pred_check_branch
    %28 = sbr.rel (0) target = $region17
  $region16: #{multi_input_model_forward.1} parent=0 // pred_region
    _
  $region17: #{multi_input_model_forward.1} parent=0 // pred_fallthru
    _
  // Predicated region
  $region18: #{multi_input_model_forward.1} parent=0 // pred_check
    _
  $region19: #{multi_input_model_forward.1} parent=0 // pred_check_branch
    %30 = sbr.rel (0) target = $region21
  $region20: #{multi_input_model_forward.1} parent=0 // pred_region
    _
  $region21: #{multi_input_model_forward.1} parent=0 // pred_fallthru
    _
  // Predicated region
  $region22: #{multi_input_model_forward.1} parent=0 // pred_check
    _
  $region23: #{multi_input_model_forward.1} parent=0 // pred_check_branch
    %32 = sbr.rel (0) target = $region25
  $region24: #{multi_input_model_forward.1} parent=0 // pred_region
    _
  $region25: #{multi_input_model_forward.1} parent=0 // pred_fallthru
    _
  // Predicated region
  $region26: #{multi_input_model_forward.1} parent=0 // pred_check
    _
  $region27: #{multi_input_model_forward.1} parent=0 // pred_check_branch
    %34 = sbr.rel (0) target = $region29
  $region28: #{multi_input_model_forward.1} parent=0 // pred_region
    _
  $region29: #{multi_input_model_forward.1} parent=0 // pred_fallthru
    _
  // Predicated region
  $region30: #{multi_input_model_forward.1} parent=0 // pred_check
    _
  $region31: #{multi_input_model_forward.1} parent=0 // pred_check_branch
    %36 = sbr.rel (0) target = $region33
  $region32: #{multi_input_model_forward.1} parent=0 // pred_region
    _
  $region33: #{multi_input_model_forward.1} parent=0 // pred_fallthru
    _
  // Predicated region
  $region34: #{multi_input_model_forward.1} parent=0 // pred_check
    _
  $region35: #{multi_input_model_forward.1} parent=0 // pred_check_branch
    %38 = sbr.rel (0) target = $region37
  $region36: #{multi_input_model_forward.1} parent=0 // pred_region
    _
  $region37: #{multi_input_model_forward.1} parent=0 // pred_fallthru
    _
  // Predicated region
  $region38: #{multi_input_model_forward.1} parent=0 // pred_check
    _
  $region39: #{multi_input_model_forward.1} parent=0 // pred_check_branch
    %40 = sbr.rel (0) target = $region41
  $region40: #{multi_input_model_forward.1} parent=0 // pred_region
    _
  $region41: #{multi_input_model_forward.1} parent=0 // pred_fallthru
    _
  // Predicated region
  $region42: #{multi_input_model_forward.1} parent=0 // pred_check
    _
  $region43: #{multi_input_model_forward.1} parent=0 // pred_check_branch
    %42 = sbr.rel (0) target = $region45
  $region44: #{multi_input_model_forward.1} parent=0 // pred_region
    _
  $region45: #{multi_input_model_forward.1} parent=0 // pred_fallthru
    _
  // Predicated region
  $region46: #{multi_input_model_forward.1} parent=0 // pred_check
    _
  $region47: #{multi_input_model_forward.1} parent=0 // pred_check_branch
    %44 = sbr.rel (0) target = $region49
  $region48: #{multi_input_model_forward.1} parent=0 // pred_region
    _
  $region49: #{multi_input_model_forward.1} parent=0 // pred_fallthru
    _
  // Predicated region
  $region50: #{multi_input_model_forward.1} parent=0 // pred_check
    _
  $region51: #{multi_input_model_forward.1} parent=0 // pred_check_branch
    %46 = sbr.rel (0) target = $region53
  $region52: #{multi_input_model_forward.1} parent=0 // pred_region
    _
  $region53: #{multi_input_model_forward.1} parent=0 // pred_fallthru
    _
  // Predicated region
  $region54: #{multi_input_model_forward.1} parent=0 // pred_check
    _
  $region55: #{multi_input_model_forward.1} parent=0 // pred_check_branch
    %48 = sbr.rel (0) target = $region57
  $region56: #{multi_input_model_forward.1} parent=0 // pred_region
    _
  $region57: #{multi_input_model_forward.1} parent=0 // pred_fallthru
    _
  // Predicated region
  $region58: #{multi_input_model_forward.1} parent=0 // pred_check
    _
  $region59: #{multi_input_model_forward.1} parent=0 // pred_check_branch
    %50 = sbr.rel (0) target = $region61
  $region60: #{multi_input_model_forward.1} parent=0 // pred_region
    _
  $region61: #{multi_input_model_forward.1} parent=0 // pred_fallthru
    _
  // Predicated region
  $region62: #{multi_input_model_forward.1} parent=0 // pred_check
    _
  $region63: #{multi_input_model_forward.1} parent=0 // pred_check_branch
    %52 = sbr.rel (0) target = $region65
  $region64: #{multi_input_model_forward.1} parent=0 // pred_region
    _
  $region65: #{multi_input_model_forward.1} parent=0 // pred_fallthru
    _
  %v54 = vld [vmem:[%s0] sm:$0xf]
  %v55 = vld [vmem:[%s1] sm:$0xf]
  %v56 = vld [vmem:[%s2] sm:$0x3]
  %v57 = vld [vmem:[%s3] sm:$0x1]
  %v59 = vlaneseq
  %v60 = vshrl.u32 %v59, 7
  %v61 = vsub.s32 0, %v60
  %v62 = vrot.slane %v57, %v61
  %vm64 = vcmask 31744
  %v66 = vsel %vm64, %v54, 0
  %vm68 = vcmask 1041408
  %v70 = vsel %vm68, %v56, 0
  %72 = vmatprep.subr.bf16.mxu0 0
  %73 = vmatpush1.bf16.msra.mxu0 0
  %74 = vmatprep.subr.bf16.mxu0 0
  %75 = vmatpush1.bf16.msra.mxu0 0
  %76 = vmatprep.subr.bf16.mxu0 0
  %77 = vmatpush1.bf16.msra.mxu0 0
  %78 = vmatprep.subr.bf16.mxu0 0
  %79 = vmatpush1.bf16.msra.mxu0 0
  %80 = vmatprep.subr.bf16.mxu0 0
  %81 = vmatpush1.bf16.msra.mxu0 0
  %82 = vmatprep.subr.bf16.mxu0 0
  %83 = vmatpush1.bf16.msra.mxu0 0
  %84 = vmatprep.subr.bf16.mxu0 0
  %85 = vmatpush1.bf16.msra.mxu0 0
  %86 = vmatprep.subr.bf16.mxu0 0
  %87 = vmatpush1.bf16.msra.mxu0 %v70
  %88 = vmatprep.subr.bf16.mxu0 0
  %89 = vmatpush2.bf16.msra.mxu0 0
  %90 = vmatprep.subr.bf16.mxu0 0
  %91 = vmatpush2.bf16.msra.mxu0 0
  %92 = vmatprep.subr.bf16.mxu0 0
  %93 = vmatpush2.bf16.msra.mxu0 0
  %94 = vmatprep.subr.bf16.mxu0 0
  %95 = vmatpush2.bf16.msra.mxu0 0
  %96 = vmatprep.subr.bf16.mxu0 0
  %97 = vmatpush2.bf16.msra.mxu0 0
  %98 = vmatprep.subr.bf16.mxu0 0
  %99 = vmatpush2.bf16.msra.mxu0 0
  %100 = vmatprep.subr.bf16.mxu0 0
  %101 = vmatpush2.bf16.msra.mxu0 0
  %102 = vmatprep.subr.bf16.mxu0 0
  %103 = vmatpush2.bf16.msra.mxu0 0
  %104 = vmatprep.mubr.bf16.mxu0 0
  %105 = vmatmul.mubr.bf16.gmra.mxu0 %v66
  %v106 = vpop.f32.mrf.mxu0
  %v107 = vadd.f32 %v62, %v106
  %v108 = vpop.f32.mrf.mxu0
  %v109 = vpop.f32.mrf.mxu0
  %v110 = vpop.f32.mrf.mxu0
  %111 = vdwg.mxu0
  %v112 = vmax.f32 %v107, 0.0
  %v113 = vpack.c.bf16 %v112, %v112
  %v114 = vld [vmem:[%s4] sm:$0x3]
  %v115 = vld [vmem:[%s5] sm:$0x1]
  %v117 = vlaneseq
  %v118 = vshrl.u32 %v117, 7
  %v119 = vsub.s32 0, %v118
  %v120 = vrot.slane %v115, %v119
  %vm122 = vcmask 23552
  %v124 = vsel %vm122, %v55, 0
  %vm126 = vcmask 1040384
  %v127 = vsel %vm126, 4294967295, 65535
  %v128 = vsel %vm68, %v127, 0
  %v130 = vand.u32 %v114, %v128
  %132 = vmatprep.subr.bf16.mxu0 0
  %133 = vmatpush1.bf16.msra.mxu0 0
  %134 = vmatprep.subr.bf16.mxu0 0
  %135 = vmatpush1.bf16.msra.mxu0 0
  %136 = vmatprep.subr.bf16.mxu0 0
  %137 = vmatpush1.bf16.msra.mxu0 0
  %138 = vmatprep.subr.bf16.mxu0 0
  %139 = vmatpush1.bf16.msra.mxu0 0
  %140 = vmatprep.subr.bf16.mxu0 0
  %141 = vmatpush1.bf16.msra.mxu0 0
  %142 = vmatprep.subr.bf16.mxu0 0
  %143 = vmatpush1.bf16.msra.mxu0 0
  %144 = vmatprep.subr.bf16.mxu0 0
  %145 = vmatpush1.bf16.msra.mxu0 0
  %146 = vmatprep.subr.bf16.mxu0 0
  %147 = vmatpush1.bf16.msra.mxu0 %v130
  %148 = vmatprep.subr.bf16.mxu0 0
  %149 = vmatpush2.bf16.msra.mxu0 0
  %150 = vmatprep.subr.bf16.mxu0 0
  %151 = vmatpush2.bf16.msra.mxu0 0
  %152 = vmatprep.subr.bf16.mxu0 0
  %153 = vmatpush2.bf16.msra.mxu0 0
  %154 = vmatprep.subr.bf16.mxu0 0
  %155 = vmatpush2.bf16.msra.mxu0 0
  %156 = vmatprep.subr.bf16.mxu0 0
  %157 = vmatpush2.bf16.msra.mxu0 0
  %158 = vmatprep.subr.bf16.mxu0 0
  %159 = vmatpush2.bf16.msra.mxu0 0
  %160 = vmatprep.subr.bf16.mxu0 0
  %161 = vmatpush2.bf16.msra.mxu0 0
  %162 = vmatprep.subr.bf16.mxu0 0
  %163 = vmatpush2.bf16.msra.mxu0 0
  %164 = vmatprep.mubr.bf16.mxu0 0
  %165 = vmatmul.mubr.bf16.gmra.mxu0 %v124
  %v166 = vpop.f32.mrf.mxu0
  %v167 = vadd.f32 %v120, %v166
  %v168 = vpop.f32.mrf.mxu0
  %v169 = vpop.f32.mrf.mxu0
  %v170 = vpop.f32.mrf.mxu0
  %171 = vdwg.mxu0
  %v172 = vmax.f32 %v167, 0.0
  %v173 = vpack.c.bf16 %v172, %v172
  %v174 = vld [vmem:[%s6] sm:$0xf]
  %v175 = vld [vmem:[%s6 + $0x4] sm:$0xf]
  %v176 = vld [vmem:[%s6 + $0x8] sm:$0xf]
  %v177 = vld [vmem:[%s6 + $0xc] sm:$0xf]
  %v178 = vld [vmem:[%s6 + $0x10] sm:$0xf]
  %v179 = vld [vmem:[%s6 + $0x14] sm:$0xf]
  %v180 = vld [vmem:[%s6 + $0x18] sm:$0xf]
  %v181 = vld [vmem:[%s6 + $0x1c] sm:$0xf]
  %v182 = vld [vmem:[%s7] sm:$0x1]
  %v184 = vlaneseq
  %v185 = vshrl.u32 %v184, 7
  %v186 = vsub.s32 0, %v185
  %v187 = vrot.slane %v182, %v186
  %v197 = vunpack.c.l.b16 %v174
  %v198 = vunpack.c.l.b16 %v175
  %v199 = vunpack.c.l.b16 %v176
  %v200 = vunpack.c.l.b16 %v177
  %v201 = vunpack.c.l.b16 %v178
  %v202 = vunpack.c.l.b16 %v179
  %v203 = vunpack.c.l.b16 %v180
  %v204 = vunpack.c.l.b16 %v181
  %v205 = vpack.c.b16 %v198, %v197
  %v206 = vpack.c.b16 %v200, %v199
  %v207 = vpack.c.b16 %v202, %v201
  %v208 = vpack.c.b16 %v204, %v203
  %vm213 = vcmask 523264
  %v215 = vsel %vm213, %v113, 0
  %217 = vmatprep.subr.bf16.mxu0 0
  %218 = vmatpush1.bf16.msra.mxu0 0
  %219 = vmatprep.subr.bf16.mxu0 0
  %220 = vmatpush1.bf16.msra.mxu0 0
  %221 = vmatprep.subr.bf16.mxu0 0
  %222 = vmatpush1.bf16.msra.mxu0 0
  %223 = vmatprep.subr.bf16.mxu0 0
  %224 = vmatpush1.bf16.msra.mxu0 0
  %225 = vmatprep.subr.bf16.mxu0 0
  %226 = vmatpush1.bf16.msra.mxu0 %v208
  %227 = vmatprep.subr.bf16.mxu0 0
  %228 = vmatpush1.bf16.msra.mxu0 %v207
  %229 = vmatprep.subr.bf16.mxu0 0
  %230 = vmatpush1.bf16.msra.mxu0 %v206
  %231 = vmatprep.subr.bf16.mxu0 0
  %232 = vmatpush1.bf16.msra.mxu0 %v205
  %233 = vmatprep.subr.bf16.mxu0 0
  %234 = vmatpush2.bf16.msra.mxu0 0
  %235 = vmatprep.subr.bf16.mxu0 0
  %236 = vmatpush2.bf16.msra.mxu0 0
  %237 = vmatprep.subr.bf16.mxu0 0
  %238 = vmatpush2.bf16.msra.mxu0 0
  %239 = vmatprep.subr.bf16.mxu0 0
  %240 = vmatpush2.bf16.msra.mxu0 0
  %241 = vmatprep.subr.bf16.mxu0 0
  %242 = vmatpush2.bf16.msra.mxu0 0
  %243 = vmatprep.subr.bf16.mxu0 0
  %244 = vmatpush2.bf16.msra.mxu0 0
  %245 = vmatprep.subr.bf16.mxu0 0
  %246 = vmatpush2.bf16.msra.mxu0 0
  %247 = vmatprep.subr.bf16.mxu0 0
  %248 = vmatpush2.bf16.msra.mxu0 0
  %249 = vmatprep.mubr.bf16.mxu0 0
  %250 = vmatmul.mubr.bf16.gmra.mxu0 %v215
  %v251 = vpop.f32.mrf.mxu0
  %v252 = vadd.f32 %v187, %v251
  %v253 = vpop.f32.mrf.mxu0
  %v254 = vpop.f32.mrf.mxu0
  %v255 = vpop.f32.mrf.mxu0
  %256 = vdwg.mxu0
  %v257 = vmax.f32 %v252, 0.0
  %v258 = vpack.c.bf16 %v257, %v257
  %v259 = vld [vmem:[%s8] sm:$0xf]
  %v260 = vld [vmem:[%s8 + $0x4] sm:$0xf]
  %v261 = vld [vmem:[%s8 + $0x8] sm:$0xf]
  %v262 = vld [vmem:[%s8 + $0xc] sm:$0xf]
  %v263 = vld [vmem:[%s8 + $0x10] sm:$0xf]
  %v264 = vld [vmem:[%s8 + $0x14] sm:$0xf]
  %v265 = vld [vmem:[%s8 + $0x18] sm:$0xf]
  %v266 = vld [vmem:[%s8 + $0x1c] sm:$0xf]
  %v267 = vld [vmem:[%s9] sm:$0x1]
  %v269 = vlaneseq
  %v270 = vshrl.u32 %v269, 7
  %v271 = vsub.s32 0, %v270
  %v272 = vrot.slane %v267, %v271
  %v282 = vunpack.c.l.b16 %v259
  %v283 = vunpack.c.l.b16 %v260
  %v284 = vunpack.c.l.b16 %v261
  %v285 = vunpack.c.l.b16 %v262
  %v286 = vunpack.c.l.b16 %v263
  %v287 = vunpack.c.l.b16 %v264
  %v288 = vunpack.c.l.b16 %v265
  %v289 = vunpack.c.l.b16 %v266
  %v290 = vpack.c.b16 %v283, %v282
  %v291 = vpack.c.b16 %v285, %v284
  %v292 = vpack.c.b16 %v287, %v286
  %v293 = vpack.c.b16 %v289, %v288
  %v299 = vsel %vm213, %v173, 0
  %301 = vmatprep.subr.bf16.mxu0 0
  %302 = vmatpush1.bf16.msra.mxu0 0
  %303 = vmatprep.subr.bf16.mxu0 0
  %304 = vmatpush1.bf16.msra.mxu0 0
  %305 = vmatprep.subr.bf16.mxu0 0
  %306 = vmatpush1.bf16.msra.mxu0 0
  %307 = vmatprep.subr.bf16.mxu0 0
  %308 = vmatpush1.bf16.msra.mxu0 0
  %309 = vmatprep.subr.bf16.mxu0 0
  %310 = vmatpush1.bf16.msra.mxu0 %v293
  %311 = vmatprep.subr.bf16.mxu0 0
  %312 = vmatpush1.bf16.msra.mxu0 %v292
  %313 = vmatprep.subr.bf16.mxu0 0
  %314 = vmatpush1.bf16.msra.mxu0 %v291
  %315 = vmatprep.subr.bf16.mxu0 0
  %316 = vmatpush1.bf16.msra.mxu0 %v290
  %317 = vmatprep.subr.bf16.mxu0 0
  %318 = vmatpush2.bf16.msra.mxu0 0
  %319 = vmatprep.subr.bf16.mxu0 0
  %320 = vmatpush2.bf16.msra.mxu0 0
  %321 = vmatprep.subr.bf16.mxu0 0
  %322 = vmatpush2.bf16.msra.mxu0 0
  %323 = vmatprep.subr.bf16.mxu0 0
  %324 = vmatpush2.bf16.msra.mxu0 0
  %325 = vmatprep.subr.bf16.mxu0 0
  %326 = vmatpush2.bf16.msra.mxu0 0
  %327 = vmatprep.subr.bf16.mxu0 0
  %328 = vmatpush2.bf16.msra.mxu0 0
  %329 = vmatprep.subr.bf16.mxu0 0
  %330 = vmatpush2.bf16.msra.mxu0 0
  %331 = vmatprep.subr.bf16.mxu0 0
  %332 = vmatpush2.bf16.msra.mxu0 0
  %333 = vmatprep.mubr.bf16.mxu0 0
  %334 = vmatmul.mubr.bf16.gmra.mxu0 %v299
  %v335 = vpop.f32.mrf.mxu0
  %v336 = vadd.f32 %v272, %v335
  %v337 = vpop.f32.mrf.mxu0
  %v338 = vpop.f32.mrf.mxu0
  %v339 = vpop.f32.mrf.mxu0
  %340 = vdwg.mxu0
  %v341 = vmax.f32 %v336, 0.0
  %v342 = vpack.c.bf16 %v341, %v341
  %v343 = vld [vmem:[%s10] sm:$0xff]
  %v344 = vld [vmem:[%s10 + $0x8] sm:$0xff]
  %v345 = vld [vmem:[%s10 + $0x10] sm:$0xff]
  %v346 = vld [vmem:[%s10 + $0x18] sm:$0xff]
  %v347 = vld [vmem:[%s10 + $0x20] sm:$0xff]
  %v348 = vld [vmem:[%s10 + $0x28] sm:$0xff]
  %v349 = vld [vmem:[%s10 + $0x30] sm:$0xff]
  %v350 = vld [vmem:[%s10 + $0x38] sm:$0xff]
  %v351 = vld [vmem:[%s10 + $0x40] sm:$0xff]
  %v352 = vld [vmem:[%s10 + $0x48] sm:$0xff]
  %v353 = vld [vmem:[%s10 + $0x50] sm:$0xff]
  %v354 = vld [vmem:[%s10 + $0x58] sm:$0xff]
  %v355 = vld [vmem:[%s10 + $0x60] sm:$0xff]
  %v356 = vld [vmem:[%s10 + $0x68] sm:$0xff]
  %v357 = vld [vmem:[%s10 + $0x70] sm:$0xff]
  %v358 = vld [vmem:[%s10 + $0x78] sm:$0xff]
  %v359 = vld [vmem:[%s10 + $0x80] sm:$0xff]
  %v360 = vld [vmem:[%s10 + $0x88] sm:$0xff]
  %v361 = vld [vmem:[%s10 + $0x90] sm:$0xff]
  %v362 = vld [vmem:[%s10 + $0x98] sm:$0xff]
  %v363 = vld [vmem:[%s10 + $0xa0] sm:$0xff]
  %v364 = vld [vmem:[%s10 + $0xa8] sm:$0xff]
  %v365 = vld [vmem:[%s10 + $0xb0] sm:$0xff]
  %v366 = vld [vmem:[%s10 + $0xb8] sm:$0xff]
  %v367 = vld [vmem:[%s10 + $0xc0] sm:$0xff]
  %v368 = vld [vmem:[%s10 + $0xc8] sm:$0xff]
  %v369 = vld [vmem:[%s10 + $0xd0] sm:$0xff]
  %v370 = vld [vmem:[%s10 + $0xd8] sm:$0xff]
  %v371 = vld [vmem:[%s10 + $0xe0] sm:$0xff]
  %v372 = vld [vmem:[%s10 + $0xe8] sm:$0xff]
  %v373 = vld [vmem:[%s10 + $0xf0] sm:$0xff]
  %v374 = vld [vmem:[%s10 + $0xf8] sm:$0xff]
  %v375 = vld [vmem:[%s11] sm:$0x3]
  %v377 = vlaneseq
  %v378 = vshrl.u32 %v377, 7
  %v379 = vsub.s32 0, %v378
  %v380 = vrot.slane %v375, %v379
  %v381 = vlaneseq
  %v382 = vshrl.u32 %v381, 7
  %v383 = vsub.s32 1, %v382
  %v384 = vrot.slane %v375, %v383
  %v419 = vunpack.c.l.b16 %v343
  %v420 = vunpack.c.h.b16 %v343
  %v421 = vunpack.c.l.b16 %v344
  %v422 = vunpack.c.h.b16 %v344
  %v423 = vunpack.c.l.b16 %v345
  %v424 = vunpack.c.h.b16 %v345
  %v425 = vunpack.c.l.b16 %v346
  %v426 = vunpack.c.h.b16 %v346
  %v427 = vunpack.c.l.b16 %v347
  %v428 = vunpack.c.h.b16 %v347
  %v429 = vunpack.c.l.b16 %v348
  %v430 = vunpack.c.h.b16 %v348
  %v431 = vunpack.c.l.b16 %v349
  %v432 = vunpack.c.h.b16 %v349
  %v433 = vunpack.c.l.b16 %v350
  %v434 = vunpack.c.h.b16 %v350
  %v435 = vunpack.c.l.b16 %v351
  %v436 = vunpack.c.h.b16 %v351
  %v437 = vunpack.c.l.b16 %v352
  %v438 = vunpack.c.h.b16 %v352
  %v439 = vunpack.c.l.b16 %v353
  %v440 = vunpack.c.h.b16 %v353
  %v441 = vunpack.c.l.b16 %v354
  %v442 = vunpack.c.h.b16 %v354
  %v443 = vunpack.c.l.b16 %v355
  %v444 = vunpack.c.h.b16 %v355
  %v445 = vunpack.c.l.b16 %v356
  %v446 = vunpack.c.h.b16 %v356
  %v447 = vunpack.c.l.b16 %v357
  %v448 = vunpack.c.h.b16 %v357
  %v449 = vunpack.c.l.b16 %v358
  %v450 = vunpack.c.h.b16 %v358
  %v451 = vunpack.c.l.b16 %v359
  %v452 = vunpack.c.h.b16 %v359
  %v453 = vunpack.c.l.b16 %v360
  %v454 = vunpack.c.h.b16 %v360
  %v455 = vunpack.c.l.b16 %v361
  %v456 = vunpack.c.h.b16 %v361
  %v457 = vunpack.c.l.b16 %v362
  %v458 = vunpack.c.h.b16 %v362
  %v459 = vunpack.c.l.b16 %v363
  %v460 = vunpack.c.h.b16 %v363
  %v461 = vunpack.c.l.b16 %v364
  %v462 = vunpack.c.h.b16 %v364
  %v463 = vunpack.c.l.b16 %v365
  %v464 = vunpack.c.h.b16 %v365
  %v465 = vunpack.c.l.b16 %v366
  %v466 = vunpack.c.h.b16 %v366
  %v467 = vunpack.c.l.b16 %v367
  %v468 = vunpack.c.h.b16 %v367
  %v469 = vunpack.c.l.b16 %v368
  %v470 = vunpack.c.h.b16 %v368
  %v471 = vunpack.c.l.b16 %v369
  %v472 = vunpack.c.h.b16 %v369
  %v473 = vunpack.c.l.b16 %v370
  %v474 = vunpack.c.h.b16 %v370
  %v475 = vunpack.c.l.b16 %v371
  %v476 = vunpack.c.h.b16 %v371
  %v477 = vunpack.c.l.b16 %v372
  %v478 = vunpack.c.h.b16 %v372
  %v479 = vunpack.c.l.b16 %v373
  %v480 = vunpack.c.h.b16 %v373
  %v481 = vunpack.c.l.b16 %v374
  %v482 = vunpack.c.h.b16 %v374
  %v483 = vpack.c.b16 %v421, %v419
  %v484 = vpack.c.b16 %v422, %v420
  %v485 = vpack.c.b16 %v425, %v423
  %v486 = vpack.c.b16 %v426, %v424
  %v487 = vpack.c.b16 %v429, %v427
  %v488 = vpack.c.b16 %v430, %v428
  %v489 = vpack.c.b16 %v433, %v431
  %v490 = vpack.c.b16 %v434, %v432
  %v491 = vpack.c.b16 %v437, %v435
  %v492 = vpack.c.b16 %v438, %v436
  %v493 = vpack.c.b16 %v441, %v439
  %v494 = vpack.c.b16 %v442, %v440
  %v495 = vpack.c.b16 %v445, %v443
  %v496 = vpack.c.b16 %v446, %v444
  %v497 = vpack.c.b16 %v449, %v447
  %v498 = vpack.c.b16 %v450, %v448
  %v499 = vpack.c.b16 %v453, %v451
  %v500 = vpack.c.b16 %v454, %v452
  %v501 = vpack.c.b16 %v457, %v455
  %v502 = vpack.c.b16 %v458, %v456
  %v503 = vpack.c.b16 %v461, %v459
  %v504 = vpack.c.b16 %v462, %v460
  %v505 = vpack.c.b16 %v465, %v463
  %v506 = vpack.c.b16 %v466, %v464
  %v507 = vpack.c.b16 %v469, %v467
  %v508 = vpack.c.b16 %v470, %v468
  %v509 = vpack.c.b16 %v473, %v471
  %v510 = vpack.c.b16 %v474, %v472
  %v511 = vpack.c.b16 %v477, %v475
  %v512 = vpack.c.b16 %v478, %v476
  %v513 = vpack.c.b16 %v481, %v479
  %v514 = vpack.c.b16 %v482, %v480
  %547 = vmatprep.subr.bf16.mxu0 %v498
  %548 = vmatpush1.bf16.msra.mxu0 %v497
  %549 = vmatprep.subr.bf16.mxu0 %v496
  %550 = vmatpush1.bf16.msra.mxu0 %v495
  %551 = vmatprep.subr.bf16.mxu0 %v494
  %552 = vmatpush1.bf16.msra.mxu0 %v493
  %553 = vmatprep.subr.bf16.mxu0 %v492
  %554 = vmatpush1.bf16.msra.mxu0 %v491
  %555 = vmatprep.subr.bf16.mxu0 %v490
  %556 = vmatpush1.bf16.msra.mxu0 %v489
  %557 = vmatprep.subr.bf16.mxu0 %v488
  %558 = vmatpush1.bf16.msra.mxu0 %v487
  %559 = vmatprep.subr.bf16.mxu0 %v486
  %560 = vmatpush1.bf16.msra.mxu0 %v485
  %561 = vmatprep.subr.bf16.mxu0 %v484
  %562 = vmatpush1.bf16.msra.mxu0 %v483
  %563 = vmatprep.subr.bf16.mxu0 %v514
  %564 = vmatpush2.bf16.msra.mxu0 %v513
  %565 = vmatprep.subr.bf16.mxu0 %v512
  %566 = vmatpush2.bf16.msra.mxu0 %v511
  %567 = vmatprep.subr.bf16.mxu0 %v510
  %568 = vmatpush2.bf16.msra.mxu0 %v509
  %569 = vmatprep.subr.bf16.mxu0 %v508
  %570 = vmatpush2.bf16.msra.mxu0 %v507
  %571 = vmatprep.subr.bf16.mxu0 %v506
  %572 = vmatpush2.bf16.msra.mxu0 %v505
  %573 = vmatprep.subr.bf16.mxu0 %v504
  %574 = vmatpush2.bf16.msra.mxu0 %v503
  %575 = vmatprep.subr.bf16.mxu0 %v502
  %576 = vmatpush2.bf16.msra.mxu0 %v501
  %577 = vmatprep.subr.bf16.mxu0 %v500
  %578 = vmatpush2.bf16.msra.mxu0 %v499
  %579 = vmatprep.mubr.bf16.mxu0 %v342
  %580 = vmatmul.mubr.bf16.gmra.mxu0 %v258
  %v581 = vpop.f32.mrf.mxu0
  %v582 = vadd.f32 %v380, %v581
  %v583 = vpop.f32.mrf.mxu0
  %v584 = vadd.f32 %v384, %v583
  %v585 = vpop.f32.mrf.mxu0
  %v586 = vpop.f32.mrf.mxu0
  %587 = vdwg.mxu0
  %v588 = vmax.f32 %v582, 0.0
  %v589 = vmax.f32 %v584, 0.0
  %v590 = vpack.c.bf16 %v588, %v588
  %v591 = vpack.c.bf16 %v589, %v589
  %v592 = vld [vmem:[%s12] sm:$0xf]
  %v593 = vld [vmem:[%s12 + $0x4] sm:$0xf]
  %v594 = vld [vmem:[%s12 + $0x8] sm:$0xf]
  %v595 = vld [vmem:[%s12 + $0xc] sm:$0xf]
  %v596 = vld [vmem:[%s12 + $0x10] sm:$0xf]
  %v597 = vld [vmem:[%s12 + $0x14] sm:$0xf]
  %v598 = vld [vmem:[%s12 + $0x18] sm:$0xf]
  %v599 = vld [vmem:[%s12 + $0x1c] sm:$0xf]
  %v600 = vld [vmem:[%s12 + $0x20] sm:$0xf]
  %v601 = vld [vmem:[%s12 + $0x24] sm:$0xf]
  %v602 = vld [vmem:[%s12 + $0x28] sm:$0xf]
  %v603 = vld [vmem:[%s12 + $0x2c] sm:$0xf]
  %v604 = vld [vmem:[%s12 + $0x30] sm:$0xf]
  %v605 = vld [vmem:[%s12 + $0x34] sm:$0xf]
  %v606 = vld [vmem:[%s12 + $0x38] sm:$0xf]
  %v607 = vld [vmem:[%s12 + $0x3c] sm:$0xf]
  %v608 = vld [vmem:[%s12 + $0x40] sm:$0xf]
  %v609 = vld [vmem:[%s12 + $0x44] sm:$0xf]
  %v610 = vld [vmem:[%s12 + $0x48] sm:$0xf]
  %v611 = vld [vmem:[%s12 + $0x4c] sm:$0xf]
  %v612 = vld [vmem:[%s12 + $0x50] sm:$0xf]
  %v613 = vld [vmem:[%s12 + $0x54] sm:$0xf]
  %v614 = vld [vmem:[%s12 + $0x58] sm:$0xf]
  %v615 = vld [vmem:[%s12 + $0x5c] sm:$0xf]
  %v616 = vld [vmem:[%s12 + $0x60] sm:$0xf]
  %v617 = vld [vmem:[%s12 + $0x64] sm:$0xf]
  %v618 = vld [vmem:[%s12 + $0x68] sm:$0xf]
  %v619 = vld [vmem:[%s12 + $0x6c] sm:$0xf]
  %v620 = vld [vmem:[%s12 + $0x70] sm:$0xf]
  %v621 = vld [vmem:[%s12 + $0x74] sm:$0xf]
  %v622 = vld [vmem:[%s12 + $0x78] sm:$0xf]
  %v623 = vld [vmem:[%s12 + $0x7c] sm:$0xf]
  %v624 = vld [vmem:[%s13] sm:$0x1]
  %v626 = vlaneseq
  %v627 = vshrl.u32 %v626, 7
  %v628 = vsub.s32 0, %v627
  %v629 = vrot.slane %v624, %v628
  %v663 = vunpack.c.l.b16 %v592
  %v664 = vunpack.c.l.b16 %v593
  %v665 = vunpack.c.l.b16 %v594
  %v666 = vunpack.c.l.b16 %v595
  %v667 = vunpack.c.l.b16 %v596
  %v668 = vunpack.c.l.b16 %v597
  %v669 = vunpack.c.l.b16 %v598
  %v670 = vunpack.c.l.b16 %v599
  %v671 = vunpack.c.l.b16 %v600
  %v672 = vunpack.c.l.b16 %v601
  %v673 = vunpack.c.l.b16 %v602
  %v674 = vunpack.c.l.b16 %v603
  %v675 = vunpack.c.l.b16 %v604
  %v676 = vunpack.c.l.b16 %v605
  %v677 = vunpack.c.l.b16 %v606
  %v678 = vunpack.c.l.b16 %v607
  %v679 = vunpack.c.l.b16 %v608
  %v680 = vunpack.c.l.b16 %v609
  %v681 = vunpack.c.l.b16 %v610
  %v682 = vunpack.c.l.b16 %v611
  %v683 = vunpack.c.l.b16 %v612
  %v684 = vunpack.c.l.b16 %v613
  %v685 = vunpack.c.l.b16 %v614
  %v686 = vunpack.c.l.b16 %v615
  %v687 = vunpack.c.l.b16 %v616
  %v688 = vunpack.c.l.b16 %v617
  %v689 = vunpack.c.l.b16 %v618
  %v690 = vunpack.c.l.b16 %v619
  %v691 = vunpack.c.l.b16 %v620
  %v692 = vunpack.c.l.b16 %v621
  %v693 = vunpack.c.l.b16 %v622
  %v694 = vunpack.c.l.b16 %v623
  %v695 = vpack.c.b16 %v664, %v663
  %v696 = vpack.c.b16 %v666, %v665
  %v697 = vpack.c.b16 %v668, %v667
  %v698 = vpack.c.b16 %v670, %v669
  %v699 = vpack.c.b16 %v672, %v671
  %v700 = vpack.c.b16 %v674, %v673
  %v701 = vpack.c.b16 %v676, %v675
  %v702 = vpack.c.b16 %v678, %v677
  %v703 = vpack.c.b16 %v680, %v679
  %v704 = vpack.c.b16 %v682, %v681
  %v705 = vpack.c.b16 %v684, %v683
  %v706 = vpack.c.b16 %v686, %v685
  %v707 = vpack.c.b16 %v688, %v687
  %v708 = vpack.c.b16 %v690, %v689
  %v709 = vpack.c.b16 %v692, %v691
  %v710 = vpack.c.b16 %v694, %v693
  %727 = vmatprep.subr.bf16.mxu0 0
  %728 = vmatpush1.bf16.msra.mxu0 %v702
  %729 = vmatprep.subr.bf16.mxu0 0
  %730 = vmatpush1.bf16.msra.mxu0 %v701
  %731 = vmatprep.subr.bf16.mxu0 0
  %732 = vmatpush1.bf16.msra.mxu0 %v700
  %733 = vmatprep.subr.bf16.mxu0 0
  %734 = vmatpush1.bf16.msra.mxu0 %v699
  %735 = vmatprep.subr.bf16.mxu0 0
  %736 = vmatpush1.bf16.msra.mxu0 %v698
  %737 = vmatprep.subr.bf16.mxu0 0
  %738 = vmatpush1.bf16.msra.mxu0 %v697
  %739 = vmatprep.subr.bf16.mxu0 0
  %740 = vmatpush1.bf16.msra.mxu0 %v696
  %741 = vmatprep.subr.bf16.mxu0 0
  %742 = vmatpush1.bf16.msra.mxu0 %v695
  %743 = vmatprep.subr.bf16.mxu0 0
  %744 = vmatpush2.bf16.msra.mxu0 %v710
  %745 = vmatprep.subr.bf16.mxu0 0
  %746 = vmatpush2.bf16.msra.mxu0 %v709
  %747 = vmatprep.subr.bf16.mxu0 0
  %748 = vmatpush2.bf16.msra.mxu0 %v708
  %749 = vmatprep.subr.bf16.mxu0 0
  %750 = vmatpush2.bf16.msra.mxu0 %v707
  %751 = vmatprep.subr.bf16.mxu0 0
  %752 = vmatpush2.bf16.msra.mxu0 %v706
  %753 = vmatprep.subr.bf16.mxu0 0
  %754 = vmatpush2.bf16.msra.mxu0 %v705
  %755 = vmatprep.subr.bf16.mxu0 0
  %756 = vmatpush2.bf16.msra.mxu0 %v704
  %757 = vmatprep.subr.bf16.mxu0 0
  %758 = vmatpush2.bf16.msra.mxu0 %v703
  %759 = vmatprep.mubr.bf16.mxu0 %v591
  %760 = vmatmul.mubr.bf16.gmra.mxu0 %v590
  %v761 = vpop.f32.mrf.mxu0
  %v762 = vadd.f32 %v629, %v761
  %v763 = vpop.f32.mrf.mxu0
  %v764 = vpop.f32.mrf.mxu0
  %v765 = vpop.f32.mrf.mxu0
  %766 = vdwg.mxu0
  %v767 = vmax.f32 %v762, 0.0
  %v768 = vpack.c.bf16 %v767, %v767
  %v769 = vld [vmem:[%s14] sm:$0xf]
  %v770 = vld [vmem:[%s14 + $0x4] sm:$0xf]
  %v771 = vld [vmem:[%s14 + $0x8] sm:$0xf]
  %v772 = vld [vmem:[%s14 + $0xc] sm:$0xf]
  %v773 = vld [vmem:[%s14 + $0x10] sm:$0xf]
  %v774 = vld [vmem:[%s14 + $0x14] sm:$0xf]
  %v775 = vld [vmem:[%s14 + $0x18] sm:$0xf]
  %v776 = vld [vmem:[%s14 + $0x1c] sm:$0xf]
  %v777 = vld [vmem:[%s14 + $0x20] sm:$0xf]
  %v778 = vld [vmem:[%s14 + $0x24] sm:$0xf]
  %v779 = vld [vmem:[%s14 + $0x28] sm:$0xf]
  %v780 = vld [vmem:[%s14 + $0x2c] sm:$0xf]
  %v781 = vld [vmem:[%s14 + $0x30] sm:$0xf]
  %v782 = vld [vmem:[%s14 + $0x34] sm:$0xf]
  %v783 = vld [vmem:[%s14 + $0x38] sm:$0xf]
  %v784 = vld [vmem:[%s14 + $0x3c] sm:$0xf]
  %v785 = vld [vmem:[%s15] sm:$0x1]
  %v787 = vlaneseq
  %v788 = vshrl.u32 %v787, 7
  %v789 = vsub.s32 0, %v788
  %v790 = vrot.slane %v785, %v789
  %v808 = vunpack.c.l.b16 %v769
  %v809 = vunpack.c.l.b16 %v770
  %v810 = vunpack.c.l.b16 %v771
  %v811 = vunpack.c.l.b16 %v772
  %v812 = vunpack.c.l.b16 %v773
  %v813 = vunpack.c.l.b16 %v774
  %v814 = vunpack.c.l.b16 %v775
  %v815 = vunpack.c.l.b16 %v776
  %v816 = vunpack.c.l.b16 %v777
  %v817 = vunpack.c.l.b16 %v778
  %v818 = vunpack.c.l.b16 %v779
  %v819 = vunpack.c.l.b16 %v780
  %v820 = vunpack.c.l.b16 %v781
  %v821 = vunpack.c.l.b16 %v782
  %v822 = vunpack.c.l.b16 %v783
  %v823 = vunpack.c.l.b16 %v784
  %v824 = vpack.c.b16 %v809, %v808
  %v825 = vpack.c.b16 %v811, %v810
  %v826 = vpack.c.b16 %v813, %v812
  %v827 = vpack.c.b16 %v815, %v814
  %v828 = vpack.c.b16 %v817, %v816
  %v829 = vpack.c.b16 %v819, %v818
  %v830 = vpack.c.b16 %v821, %v820
  %v831 = vpack.c.b16 %v823, %v822
  %840 = vmatprep.subr.bf16.mxu0 0
  %841 = vmatpush1.bf16.msra.mxu0 %v831
  %842 = vmatprep.subr.bf16.mxu0 0
  %843 = vmatpush1.bf16.msra.mxu0 %v830
  %844 = vmatprep.subr.bf16.mxu0 0
  %845 = vmatpush1.bf16.msra.mxu0 %v829
  %846 = vmatprep.subr.bf16.mxu0 0
  %847 = vmatpush1.bf16.msra.mxu0 %v828
  %848 = vmatprep.subr.bf16.mxu0 0
  %849 = vmatpush1.bf16.msra.mxu0 %v827
  %850 = vmatprep.subr.bf16.mxu0 0
  %851 = vmatpush1.bf16.msra.mxu0 %v826
  %852 = vmatprep.subr.bf16.mxu0 0
  %853 = vmatpush1.bf16.msra.mxu0 %v825
  %854 = vmatprep.subr.bf16.mxu0 0
  %855 = vmatpush1.bf16.msra.mxu0 %v824
  %856 = vmatprep.subr.bf16.mxu0 0
  %857 = vmatpush2.bf16.msra.mxu0 0
  %858 = vmatprep.subr.bf16.mxu0 0
  %859 = vmatpush2.bf16.msra.mxu0 0
  %860 = vmatprep.subr.bf16.mxu0 0
  %861 = vmatpush2.bf16.msra.mxu0 0
  %862 = vmatprep.subr.bf16.mxu0 0
  %863 = vmatpush2.bf16.msra.mxu0 0
  %864 = vmatprep.subr.bf16.mxu0 0
  %865 = vmatpush2.bf16.msra.mxu0 0
  %866 = vmatprep.subr.bf16.mxu0 0
  %867 = vmatpush2.bf16.msra.mxu0 0
  %868 = vmatprep.subr.bf16.mxu0 0
  %869 = vmatpush2.bf16.msra.mxu0 0
  %870 = vmatprep.subr.bf16.mxu0 0
  %871 = vmatpush2.bf16.msra.mxu0 0
  %872 = vmatprep.mubr.bf16.mxu0 0
  %873 = vmatmul.mubr.bf16.gmra.mxu0 %v768
  %v874 = vpop.f32.mrf.mxu0
  %v875 = vadd.f32 %v790, %v874
  %v876 = vpop.f32.mrf.mxu0
  %v877 = vpop.f32.mrf.mxu0
  %v878 = vpop.f32.mrf.mxu0
  %879 = vdwg.mxu0
  %v880 = vpack.c.bf16 %v875, %v875
  %881 = vst [vmem:[%s16] sm:$0xf] %v880
  // Predicated region
  $region66: #{multi_input_model_forward.1} parent=0 // pred_check
    _
  $region67: #{multi_input_model_forward.1} parent=0 // pred_check_branch
    %883 = sbr.rel (0) target = $region69
  $region68: #{multi_input_model_forward.1} parent=0 // pred_region
    _
  $region69: #{multi_input_model_forward.1} parent=0 // pred_fallthru
    _
  // Predicated region
  $region70: #{multi_input_model_forward.1} parent=0 // pred_check
    _
  $region71: #{multi_input_model_forward.1} parent=0 // pred_check_branch
    %885 = sbr.rel (0) target = $region73
  $region72: #{multi_input_model_forward.1} parent=0 // pred_region
    _
  $region73: #{multi_input_model_forward.1} parent=0 // pred_fallthru
    _

</llo_original>
